<compile_context>
chip_gen: v5e
topology: v5e:2x2
jax: 0.10.0
libtpu: 0.0.40
codegen_flags: <defaults>
</compile_context>

<pallas_src>
import jax
import jax.numpy as jnp
from jax.experimental import pallas as pl
from jax.experimental.pallas import tpu as pltpu


_LANE = 128        # lane-dense padding for the class axis used inside the kernel
_NEG = -1e30       # sentinel for padded logit columns (drops out of softmax)


def _round_up(x, m):
    return (x + m - 1) // m * m


def _mlp_kernel(temp_ref, x_ref,
                w1_ref, t1_ref, w2_ref, t2_ref,
                w3_ref, t3_ref, w4_ref, t4_ref,
                w5_ref, b5_ref,
                logits_ref, probs_ref):
    # Cast to bf16 in-kernel (avoids a separate HBM-roundtrip cast op in XLA).
    h = x_ref[...].astype(jnp.bfloat16)

    def layer(h, w_ref, t_ref):
        z = jnp.dot(h, w_ref[...], preferred_element_type=jnp.float32)
        z = jnp.maximum(z + t_ref[...], 0.0)        # folded bias/BN + ReLU (f32)
        return z.astype(jnp.bfloat16)               # bf16 feeds next MXU matmul

    h = layer(h, w1_ref, t1_ref)
    # dropout(p=0.001) is identity in eval mode
    h = layer(h, w2_ref, t2_ref)
    h = layer(h, w3_ref, t3_ref)
    h = layer(h, w4_ref, t4_ref)

    # Lane-dense (tile_b, n_pad) compute; padded columns carry -1e30 bias so
    # they vanish in the softmax.
    logits = jnp.dot(h, w5_ref[...], preferred_element_type=jnp.float32) + b5_ref[...]

    c = logits_ref.shape[1]
    logits_ref[...] = logits[:, :c]                 # write only the real classes

    # softmax(logits / temperature); exact divide so rows sum to 1.
    inv_t = 1.0 / temp_ref[0, 0]
    z = logits * inv_t
    z = z - jnp.max(z, axis=1, keepdims=True)
    e = jnp.exp(z)
    probs = e * (1.0 / jnp.sum(e, axis=1, keepdims=True))
    probs_ref[...] = probs[:, :c]


def gasd_forward(x, params, temperature=1.0, tile_b=2048):
    """params: w1..w5 ([in,out]), b1..b5, bn{1..4}_{gamma,beta,mean,var}."""
    eps = 1e-5
    B, input_dim = x.shape
    C = params["w5"].shape[1]
    n_pad = _round_up(max(C, 1), _LANE)             # padded class axis (VMEM only)

    # --- batch tile selection ------------------------------------------------
    # multiple of 16 sublanes (bf16 packs 16 rows/vreg); capped so
    #  * v7x gets >= 2 grid steps (one per TensorCore) whenever B allows,
    #  * the per-step working set fits the scoped-VMEM default on every gen.
    half = _round_up(-(-B // 2), 16)
    tile_b = max(16, min(_round_up(tile_b, 16), half))
    per_row_bytes = 2 * input_dim * 4 + 6 * n_pad * 4 + 4 * C * 4
    max_rows = max(16, (12 * 1024 * 1024 // per_row_bytes) // 16 * 16)
    tile_b = min(tile_b, max_rows)

    B_pad = _round_up(B, tile_b)
    if B_pad != B:
        x = jnp.pad(x, ((0, B_pad - B), (0, 0)))

    temp = jnp.full((1, 1), temperature, jnp.float32)

    args = [temp, x]
    in_specs = [
        pl.BlockSpec(memory_space=pltpu.MemorySpace.SMEM),          # temperature
        pl.BlockSpec((tile_b, input_dim), lambda i: (i, 0)),        # x tile (f32)
    ]

    def resident(shape):
        # same block index every grid step -> stays resident in VMEM
        return pl.BlockSpec(shape, lambda i: (0, 0))

    # Layers 1..4: fold bias + eval BatchNorm into (W', shift').
    for li in range(1, 5):
        g = params[f"bn{li}_gamma"]
        be = params[f"bn{li}_beta"]
        m = params[f"bn{li}_mean"]
        v = params[f"bn{li}_var"]
        scale = g / jnp.sqrt(v + eps)
        w_fold = (params[f"w{li}"] * scale[None, :]).astype(jnp.bfloat16)
        shift = (params[f"b{li}"] * scale + be - m * scale).reshape(1, -1).astype(jnp.float32)
        args += [w_fold, shift]
        in_specs += [resident(w_fold.shape), resident(shift.shape)]

    # Layer 5: pad the class axis to 128 lanes (zeros in W, -1e30 in bias).
    w5 = params["w5"]
    w5_pad = jnp.zeros((w5.shape[0], n_pad), jnp.float32).at[:, :C].set(w5).astype(jnp.bfloat16)
    b5_pad = jnp.full((1, n_pad), _NEG, jnp.float32).at[0, :C].set(params["b5"])
    args += [w5_pad, b5_pad]
    in_specs += [resident(w5_pad.shape), resident(b5_pad.shape)]

    grid = (B_pad // tile_b,)
    # Narrow HBM writeback: only the real classes leave the chip.
    out_specs = (
        pl.BlockSpec((tile_b, C), lambda i: (i, 0)),
        pl.BlockSpec((tile_b, C), lambda i: (i, 0)),
    )
    out_shape = (
        jax.ShapeDtypeStruct((B_pad, C), jnp.float32),
        jax.ShapeDtypeStruct((B_pad, C), jnp.float32),
    )

    flops = 2 * B_pad * (input_dim * 128 + 128 * 64 + 64 * 32 + 32 * 16 + 16 * n_pad)
    bytes_accessed = (
        B_pad * input_dim * 4
        + sum(int(a.size) * a.dtype.itemsize for a in args[2:])
        + 2 * B_pad * C * 4
    )
    cost = pl.CostEstimate(flops=flops,
                           transcendentals=B_pad * n_pad,
                           bytes_accessed=bytes_accessed)

    logits_p, probs_p = pl.pallas_call(
        _mlp_kernel,
        grid=grid,
        in_specs=in_specs,
        out_specs=out_specs,
        out_shape=out_shape,
        compiler_params=pltpu.CompilerParams(
            dimension_semantics=("parallel",),
            vmem_limit_bytes=32 * 1024 * 1024),
        cost_estimate=cost,
    )(*args)

    return logits_p[:B], probs_p[:B]


def init_params(key, input_dim, num_classes):
    dims = [input_dim, 128, 64, 32, 16, num_classes]
    params = {}
    keys = jax.random.split(key, 32)
    ki = 0
    for i in range(1, 6):
        fan_in, fan_out = dims[i - 1], dims[i]
        bound = 1.0 / jnp.sqrt(fan_in)
        # PyTorch Linear weight is [out, in]; store transposed [in, out] for x @ W.
        params[f"w{i}"] = jax.random.uniform(keys[ki], (fan_in, fan_out), jnp.float32,
                                             -bound, bound); ki += 1
        params[f"b{i}"] = jax.random.uniform(keys[ki], (fan_out,), jnp.float32,
                                             -bound, bound); ki += 1
    for i in range(1, 5):
        n = dims[i]
        params[f"bn{i}_gamma"] = 1.0 + 0.1 * jax.random.normal(keys[ki], (n,), jnp.float32); ki += 1
        params[f"bn{i}_beta"] = 0.1 * jax.random.normal(keys[ki], (n,), jnp.float32); ki += 1
        params[f"bn{i}_mean"] = 0.05 * jax.random.normal(keys[ki], (n,), jnp.float32); ki += 1
        params[f"bn{i}_var"] = jnp.abs(1.0 + 0.1 * jax.random.normal(keys[ki], (n,), jnp.float32)); ki += 1
    return params


def reference_forward(x, params, temperature=1.0):
    eps = 1e-5
    h = x
    for i in range(1, 5):
        z = h @ params[f"w{i}"] + params[f"b{i}"]
        g, b = params[f"bn{i}_gamma"], params[f"bn{i}_beta"]
        m, v = params[f"bn{i}_mean"], params[f"bn{i}_var"]
        z = (z - m) / jnp.sqrt(v + eps) * g + b
        h = jnp.maximum(z, 0.0)
    logits = h @ params["w5"] + params["b5"]
    probs = jax.nn.softmax(logits / temperature, axis=1)
    return logits, probs


if __name__ == "__main__":
    key = jax.random.PRNGKey(0)
    k_x, k_p, k_x2 = jax.random.split(key, 3)

    batch, input_dim, num_classes = 8, 32, 4
    params = init_params(k_p, input_dim, num_classes)

    # Tolerances are for bf16 matmul inputs with f32 accumulation.
    def check(xv, tile_b, temperature=1.0):
        logits, probs = gasd_forward(xv, params, temperature=temperature, tile_b=tile_b)
        jax.block_until_ready((logits, probs))
        ref_logits, ref_probs = reference_forward(xv, params, temperature=temperature)
        assert logits.shape == ref_logits.shape and probs.shape == ref_probs.shape
        assert jnp.allclose(logits, ref_logits, atol=5e-2, rtol=5e-2), "logits mismatch"
        assert jnp.allclose(probs, ref_probs, atol=2e-2, rtol=2e-2), "probs mismatch"
        assert jnp.allclose(jnp.sum(probs, axis=1), 1.0, atol=1e-3), "probs not normalized"

    # single-tile case
    x = jax.random.normal(k_x, (batch, input_dim), jnp.float32)
    check(x, tile_b=512)
    check(x, tile_b=512, temperature=2.0)

    # multi-tile case: grid of 3, batch padded 300 -> 384 then sliced back
    x2 = jax.random.normal(k_x2, (300, input_dim), jnp.float32)
    check(x2, tile_b=128)

    print("KERNEL_OK")
</pallas_src>

<mosaic_0001>
module attributes {stable_mosaic.version = 11 : i64} {
  func.func @_mlp_kernel(%arg0: i32, %arg1: memref<1x1xf32, #tpu.memory_space<smem>>, %arg2: memref<16x32xf32, #tpu.memory_space<vmem>>, %arg3: memref<32x128xbf16, #tpu.memory_space<vmem>>, %arg4: memref<1x128xf32, #tpu.memory_space<vmem>>, %arg5: memref<128x64xbf16, #tpu.memory_space<vmem>>, %arg6: memref<1x64xf32, #tpu.memory_space<vmem>>, %arg7: memref<64x32xbf16, #tpu.memory_space<vmem>>, %arg8: memref<1x32xf32, #tpu.memory_space<vmem>>, %arg9: memref<32x16xbf16, #tpu.memory_space<vmem>>, %arg10: memref<1x16xf32, #tpu.memory_space<vmem>>, %arg11: memref<16x128xbf16, #tpu.memory_space<vmem>>, %arg12: memref<1x128xf32, #tpu.memory_space<vmem>>, %arg13: memref<16x4xf32, #tpu.memory_space<vmem>>, %arg14: memref<16x4xf32, #tpu.memory_space<vmem>>) attributes {dimension_semantics = [#tpu.dimension_semantics<parallel>], iteration_bounds = array<i64: 1>, scalar_prefetch = 0 : i64, scratch_operands = 0 : i64, tpu.core_type = #tpu.core_type<tc>, window_params = [{transform_indices = @transform_0, window_bounds = array<i64: 1, 1>}, {transform_indices = @transform_1, window_bounds = array<i64: 16, 32>}, {pipeline_mode = #tpu.pipeline_mode<synchronous>, transform_indices = @transform_2, window_bounds = array<i64: 32, 128>}, {pipeline_mode = #tpu.pipeline_mode<synchronous>, transform_indices = @transform_3, window_bounds = array<i64: 1, 128>}, {pipeline_mode = #tpu.pipeline_mode<synchronous>, transform_indices = @transform_4, window_bounds = array<i64: 128, 64>}, {pipeline_mode = #tpu.pipeline_mode<synchronous>, transform_indices = @transform_5, window_bounds = array<i64: 1, 64>}, {pipeline_mode = #tpu.pipeline_mode<synchronous>, transform_indices = @transform_6, window_bounds = array<i64: 64, 32>}, {pipeline_mode = #tpu.pipeline_mode<synchronous>, transform_indices = @transform_7, window_bounds = array<i64: 1, 32>}, {pipeline_mode = #tpu.pipeline_mode<synchronous>, transform_indices = @transform_8, window_bounds = array<i64: 32, 16>}, {pipeline_mode = #tpu.pipeline_mode<synchronous>, transform_indices = @transform_9, window_bounds = array<i64: 1, 16>}, {pipeline_mode = #tpu.pipeline_mode<synchronous>, transform_indices = @transform_10, window_bounds = array<i64: 16, 128>}, {pipeline_mode = #tpu.pipeline_mode<synchronous>, transform_indices = @transform_11, window_bounds = array<i64: 1, 128>}, {transform_indices = @transform_12, window_bounds = array<i64: 16, 4>}, {transform_indices = @transform_13, window_bounds = array<i64: 16, 4>}]} {
    %c0 = arith.constant 0 : index
    %c0_0 = arith.constant 0 : index
    %0 = vector.load %arg2[%c0, %c0_0] : memref<16x32xf32, #tpu.memory_space<vmem>>, vector<16x32xf32>
    %1 = arith.truncf %0 : vector<16x32xf32> to vector<16x32xbf16>
    %c0_1 = arith.constant 0 : index
    %c0_2 = arith.constant 0 : index
    %2 = vector.load %arg3[%c0_1, %c0_2] : memref<32x128xbf16, #tpu.memory_space<vmem>>, vector<32x128xbf16>
    %cst = arith.constant dense<0.000000e+00> : vector<16x128xf32>
    %3 = tpu.matmul %1, %2, %cst {dimension_numbers = #tpu.dot_dimension_numbers<[1], [0], [0], [1], [0, 0, 1, 1], [], []>} : vector<16x32xbf16>, vector<32x128xbf16>, vector<16x128xf32> -> vector<16x128xf32>
    %c0_3 = arith.constant 0 : index
    %c0_4 = arith.constant 0 : index
    %4 = vector.load %arg4[%c0_3, %c0_4] : memref<1x128xf32, #tpu.memory_space<vmem>>, vector<1x128xf32>
    %5 = vector.broadcast %4 : vector<1x128xf32> to vector<16x128xf32>
    %6 = arith.addf %3, %5 : vector<16x128xf32>
    %cst_5 = arith.constant 0.000000e+00 : f32
    %7 = vector.broadcast %cst_5 : f32 to vector<16x128xf32>
    %8 = arith.maximumf %6, %7 : vector<16x128xf32>
    %9 = arith.truncf %8 : vector<16x128xf32> to vector<16x128xbf16>
    %c0_6 = arith.constant 0 : index
    %c0_7 = arith.constant 0 : index
    %10 = vector.load %arg5[%c0_6, %c0_7] : memref<128x64xbf16, #tpu.memory_space<vmem>>, vector<128x64xbf16>
    %cst_8 = arith.constant dense<0.000000e+00> : vector<16x64xf32>
    %11 = tpu.matmul %9, %10, %cst_8 {dimension_numbers = #tpu.dot_dimension_numbers<[1], [0], [0], [1], [0, 0, 1, 1], [], []>} : vector<16x128xbf16>, vector<128x64xbf16>, vector<16x64xf32> -> vector<16x64xf32>
    %c0_9 = arith.constant 0 : index
    %c0_10 = arith.constant 0 : index
    %12 = vector.load %arg6[%c0_9, %c0_10] : memref<1x64xf32, #tpu.memory_space<vmem>>, vector<1x64xf32>
    %13 = vector.broadcast %12 : vector<1x64xf32> to vector<16x64xf32>
    %14 = arith.addf %11, %13 : vector<16x64xf32>
    %cst_11 = arith.constant 0.000000e+00 : f32
    %15 = vector.broadcast %cst_11 : f32 to vector<16x64xf32>
    %16 = arith.maximumf %14, %15 : vector<16x64xf32>
    %17 = arith.truncf %16 : vector<16x64xf32> to vector<16x64xbf16>
    %c0_12 = arith.constant 0 : index
    %c0_13 = arith.constant 0 : index
    %18 = vector.load %arg7[%c0_12, %c0_13] : memref<64x32xbf16, #tpu.memory_space<vmem>>, vector<64x32xbf16>
    %cst_14 = arith.constant dense<0.000000e+00> : vector<16x32xf32>
    %19 = tpu.matmul %17, %18, %cst_14 {dimension_numbers = #tpu.dot_dimension_numbers<[1], [0], [0], [1], [0, 0, 1, 1], [], []>} : vector<16x64xbf16>, vector<64x32xbf16>, vector<16x32xf32> -> vector<16x32xf32>
    %c0_15 = arith.constant 0 : index
    %c0_16 = arith.constant 0 : index
    %20 = vector.load %arg8[%c0_15, %c0_16] : memref<1x32xf32, #tpu.memory_space<vmem>>, vector<1x32xf32>
    %21 = vector.broadcast %20 : vector<1x32xf32> to vector<16x32xf32>
    %22 = arith.addf %19, %21 : vector<16x32xf32>
    %cst_17 = arith.constant 0.000000e+00 : f32
    %23 = vector.broadcast %cst_17 : f32 to vector<16x32xf32>
    %24 = arith.maximumf %22, %23 : vector<16x32xf32>
    %25 = arith.truncf %24 : vector<16x32xf32> to vector<16x32xbf16>
    %c0_18 = arith.constant 0 : index
    %c0_19 = arith.constant 0 : index
    %26 = vector.load %arg9[%c0_18, %c0_19] : memref<32x16xbf16, #tpu.memory_space<vmem>>, vector<32x16xbf16>
    %cst_20 = arith.constant dense<0.000000e+00> : vector<16x16xf32>
    %27 = tpu.matmul %25, %26, %cst_20 {dimension_numbers = #tpu.dot_dimension_numbers<[1], [0], [0], [1], [0, 0, 1, 1], [], []>} : vector<16x32xbf16>, vector<32x16xbf16>, vector<16x16xf32> -> vector<16x16xf32>
    %c0_21 = arith.constant 0 : index
    %c0_22 = arith.constant 0 : index
    %28 = vector.load %arg10[%c0_21, %c0_22] : memref<1x16xf32, #tpu.memory_space<vmem>>, vector<1x16xf32>
    %29 = vector.broadcast %28 : vector<1x16xf32> to vector<16x16xf32>
    %30 = arith.addf %27, %29 : vector<16x16xf32>
    %cst_23 = arith.constant 0.000000e+00 : f32
    %31 = vector.broadcast %cst_23 : f32 to vector<16x16xf32>
    %32 = arith.maximumf %30, %31 : vector<16x16xf32>
    %33 = arith.truncf %32 : vector<16x16xf32> to vector<16x16xbf16>
    %c0_24 = arith.constant 0 : index
    %c0_25 = arith.constant 0 : index
    %34 = vector.load %arg11[%c0_24, %c0_25] : memref<16x128xbf16, #tpu.memory_space<vmem>>, vector<16x128xbf16>
    %cst_26 = arith.constant dense<0.000000e+00> : vector<16x128xf32>
    %35 = tpu.matmul %33, %34, %cst_26 {dimension_numbers = #tpu.dot_dimension_numbers<[1], [0], [0], [1], [0, 0, 1, 1], [], []>} : vector<16x16xbf16>, vector<16x128xbf16>, vector<16x128xf32> -> vector<16x128xf32>
    %c0_27 = arith.constant 0 : index
    %c0_28 = arith.constant 0 : index
    %36 = vector.load %arg12[%c0_27, %c0_28] : memref<1x128xf32, #tpu.memory_space<vmem>>, vector<1x128xf32>
    %37 = vector.broadcast %36 : vector<1x128xf32> to vector<16x128xf32>
    %38 = arith.addf %35, %37 : vector<16x128xf32>
    %39 = vector.extract_strided_slice %38 {offsets = [0, 0], sizes = [16, 4], strides = [1, 1]} : vector<16x128xf32> to vector<16x4xf32>
    %c0_29 = arith.constant 0 : index
    %c0_30 = arith.constant 0 : index
    %40 = vector.load %arg13[%c0_29, %c0_30] : memref<16x4xf32, #tpu.memory_space<vmem>>, vector<16x4xf32>
    tpu.vector_store %arg13[%c0_29, %c0_30], %39 {strides = array<i32>} : memref<16x4xf32, #tpu.memory_space<vmem>>, vector<16x4xf32>,
    %c0_31 = arith.constant 0 : index
    %c0_32 = arith.constant 0 : index
    %41 = memref.load %arg1[%c0_31, %c0_32] : memref<1x1xf32, #tpu.memory_space<smem>>
    %cst_33 = arith.constant 1.000000e+00 : f32
    %42 = arith.divf %cst_33, %41 : f32
    %43 = vector.broadcast %42 : f32 to vector<16x128xf32>
    %44 = arith.mulf %38, %43 : vector<16x128xf32>
    %cst_34 = arith.constant dense<0xFF800000> : vector<16xf32>
    %45 = vector.multi_reduction <maximumf>, %44, %cst_34 [1] : vector<16x128xf32> to vector<16xf32>
    %46 = vector.shape_cast %45 : vector<16xf32> to vector<16x1xf32>
    %47 = vector.broadcast %46 : vector<16x1xf32> to vector<16x128xf32>
    %48 = arith.subf %44, %47 : vector<16x128xf32>
    %49 = math.exp %48 : vector<16x128xf32>
    %cst_35 = arith.constant dense<0.000000e+00> : vector<16xf32>
    %50 = vector.multi_reduction <add>, %49, %cst_35 [1] : vector<16x128xf32> to vector<16xf32>
    %51 = vector.shape_cast %50 : vector<16xf32> to vector<16x1xf32>
    %cst_36 = arith.constant 1.000000e+00 : f32
    %52 = vector.broadcast %cst_36 : f32 to vector<16x1xf32>
    %53 = arith.divf %52, %51 : vector<16x1xf32>
    %54 = vector.broadcast %53 : vector<16x1xf32> to vector<16x128xf32>
    %55 = arith.mulf %49, %54 : vector<16x128xf32>
    %56 = vector.extract_strided_slice %55 {offsets = [0, 0], sizes = [16, 4], strides = [1, 1]} : vector<16x128xf32> to vector<16x4xf32>
    %c0_37 = arith.constant 0 : index
    %c0_38 = arith.constant 0 : index
    %57 = vector.load %arg14[%c0_37, %c0_38] : memref<16x4xf32, #tpu.memory_space<vmem>>, vector<16x4xf32>
    tpu.vector_store %arg14[%c0_37, %c0_38], %56 {strides = array<i32>} : memref<16x4xf32, #tpu.memory_space<vmem>>, vector<16x4xf32>,
    return
  }
  func.func @transform_0(%arg0: i32) -> (i32, i32) {
    %c0_i32 = arith.constant 0 : i32
    %c0_i32_0 = arith.constant 0 : i32
    %c0_i32_1 = arith.constant 0 : i32
    return %c0_i32, %c0_i32_0 : i32, i32
  }
  func.func @transform_1(%arg0: i32) -> (i32, i32) {
    %c0_i32 = arith.constant 0 : i32
    %c0_i32_0 = arith.constant 0 : i32
    return %arg0, %c0_i32 : i32, i32
  }
  func.func @transform_2(%arg0: i32) -> (i32, i32) {
    %c0_i32 = arith.constant 0 : i32
    %c0_i32_0 = arith.constant 0 : i32
    %c0_i32_1 = arith.constant 0 : i32
    return %c0_i32, %c0_i32_0 : i32, i32
  }
  func.func @transform_3(%arg0: i32) -> (i32, i32) {
    %c0_i32 = arith.constant 0 : i32
    %c0_i32_0 = arith.constant 0 : i32
    %c0_i32_1 = arith.constant 0 : i32
    return %c0_i32, %c0_i32_0 : i32, i32
  }
  func.func @transform_4(%arg0: i32) -> (i32, i32) {
    %c0_i32 = arith.constant 0 : i32
    %c0_i32_0 = arith.constant 0 : i32
    %c0_i32_1 = arith.constant 0 : i32
    return %c0_i32, %c0_i32_0 : i32, i32
  }
  func.func @transform_5(%arg0: i32) -> (i32, i32) {
    %c0_i32 = arith.constant 0 : i32
    %c0_i32_0 = arith.constant 0 : i32
    %c0_i32_1 = arith.constant 0 : i32
    return %c0_i32, %c0_i32_0 : i32, i32
  }
  func.func @transform_6(%arg0: i32) -> (i32, i32) {
    %c0_i32 = arith.constant 0 : i32
    %c0_i32_0 = arith.constant 0 : i32
    %c0_i32_1 = arith.constant 0 : i32
    return %c0_i32, %c0_i32_0 : i32, i32
  }
  func.func @transform_7(%arg0: i32) -> (i32, i32) {
    %c0_i32 = arith.constant 0 : i32
    %c0_i32_0 = arith.constant 0 : i32
    %c0_i32_1 = arith.constant 0 : i32
    return %c0_i32, %c0_i32_0 : i32, i32
  }
  func.func @transform_8(%arg0: i32) -> (i32, i32) {
    %c0_i32 = arith.constant 0 : i32
    %c0_i32_0 = arith.constant 0 : i32
    %c0_i32_1 = arith.constant 0 : i32
    return %c0_i32, %c0_i32_0 : i32, i32
  }
  func.func @transform_9(%arg0: i32) -> (i32, i32) {
    %c0_i32 = arith.constant 0 : i32
    %c0_i32_0 = arith.constant 0 : i32
    %c0_i32_1 = arith.constant 0 : i32
    return %c0_i32, %c0_i32_0 : i32, i32
  }
  func.func @transform_10(%arg0: i32) -> (i32, i32) {
    %c0_i32 = arith.constant 0 : i32
    %c0_i32_0 = arith.constant 0 : i32
    %c0_i32_1 = arith.constant 0 : i32
    return %c0_i32, %c0_i32_0 : i32, i32
  }
  func.func @transform_11(%arg0: i32) -> (i32, i32) {
    %c0_i32 = arith.constant 0 : i32
    %c0_i32_0 = arith.constant 0 : i32
    %c0_i32_1 = arith.constant 0 : i32
    return %c0_i32, %c0_i32_0 : i32, i32
  }
  func.func @transform_12(%arg0: i32) -> (i32, i32) {
    %c0_i32 = arith.constant 0 : i32
    %c0_i32_0 = arith.constant 0 : i32
    return %arg0, %c0_i32 : i32, i32
  }
  func.func @transform_13(%arg0: i32) -> (i32, i32) {
    %c0_i32 = arith.constant 0 : i32
    %c0_i32_0 = arith.constant 0 : i32
    return %arg0, %c0_i32 : i32, i32
  }
}

</mosaic_0001>

<llo_original>
// kernel: tpu_custom_call.1
$region0: #{tpu_custom_call.1}
  #allocation0 [shape = 'u32[]', space=smem, size = 0x4, offset = 0x4, fixed_abs, tag = 'smem constant byte address 0x4 - core index']
  #allocation1 [shape = 'u32[72,128]{1,0:T(1,128)}', space=vmem, size = 0x9000, scoped, tag = 'internal scratch']
  #allocation2 [shape = 'f32[1,1]{1,0:T(1,128)S(6)}', space=smem, size = 0x200, scoped, tag = 'scoped memory for tpu_custom_call.1']
  %s0 = inlined_call_operand.<no memory space> [shape: f32[1,1], index: 0, kind: input, shape index: {}]
  %s1 = inlined_call_operand.vmem [shape: f32[16,32], index: 1, kind: input, shape index: {}]
  %s2 = inlined_call_operand.vmem [shape: bf16[32,128], index: 2, kind: input, shape index: {}]
  %s3 = inlined_call_operand.vmem [shape: f32[1,128], index: 3, kind: input, shape index: {}]
  %s4 = inlined_call_operand.vmem [shape: bf16[128,64], index: 4, kind: input, shape index: {}]
  %s5 = inlined_call_operand.vmem [shape: f32[1,64], index: 5, kind: input, shape index: {}]
  %s6 = inlined_call_operand.vmem [shape: bf16[64,32], index: 6, kind: input, shape index: {}]
  %s7 = inlined_call_operand.vmem [shape: f32[1,32], index: 7, kind: input, shape index: {}]
  %s8 = inlined_call_operand.vmem [shape: bf16[32,16], index: 8, kind: input, shape index: {}]
  %s9 = inlined_call_operand.vmem [shape: f32[1,16], index: 9, kind: input, shape index: {}]
  %s10 = inlined_call_operand.vmem [shape: bf16[16,128], index: 10, kind: input, shape index: {}]
  %s11 = inlined_call_operand.vmem [shape: f32[1,128], index: 11, kind: input, shape index: {}]
  %s12 = inlined_call_operand.vmem [shape: f32[16,4], index: 12, kind: output, shape index: {0}]
  %s13 = inlined_call_operand.vmem [shape: f32[16,4], index: 13, kind: output, shape index: {1}]
  %14 = xla_tuple %s12, %s13
  %s15 = sld [smem:[#allocation0]]
  $region66: #{tpu_custom_call.1} parent=0
    _
  %s17 = ssub.s32 1, %s15
  %s18 = scalar_select 0, %s17, %s15
  %19 = sst [smem:[#allocation2]] %s0
  // Predicated region
  $region2: #{tpu_custom_call.1} parent=0 // pred_check
    _
  $region3: #{tpu_custom_call.1} parent=0 // pred_check_branch
    %21 = sbr.rel (0) target = $region5
  $region4: #{tpu_custom_call.1} parent=0 // pred_region
    _
  $region5: #{tpu_custom_call.1} parent=0 // pred_fallthru
    _
  // Predicated region
  $region6: #{tpu_custom_call.1} parent=0 // pred_check
    _
  $region7: #{tpu_custom_call.1} parent=0 // pred_check_branch
    %23 = sbr.rel (0) target = $region9
  $region8: #{tpu_custom_call.1} parent=0 // pred_region
    _
  $region9: #{tpu_custom_call.1} parent=0 // pred_fallthru
    _
  // Predicated region
  $region10: #{tpu_custom_call.1} parent=0 // pred_check
    _
  $region11: #{tpu_custom_call.1} parent=0 // pred_check_branch
    %25 = sbr.rel (0) target = $region13
  $region12: #{tpu_custom_call.1} parent=0 // pred_region
    _
  $region13: #{tpu_custom_call.1} parent=0 // pred_fallthru
    _
  // Predicated region
  $region14: #{tpu_custom_call.1} parent=0 // pred_check
    _
  $region15: #{tpu_custom_call.1} parent=0 // pred_check_branch
    %27 = sbr.rel (0) target = $region17
  $region16: #{tpu_custom_call.1} parent=0 // pred_region
    _
  $region17: #{tpu_custom_call.1} parent=0 // pred_fallthru
    _
  // Predicated region
  $region18: #{tpu_custom_call.1} parent=0 // pred_check
    _
  $region19: #{tpu_custom_call.1} parent=0 // pred_check_branch
    %29 = sbr.rel (0) target = $region21
  $region20: #{tpu_custom_call.1} parent=0 // pred_region
    _
  $region21: #{tpu_custom_call.1} parent=0 // pred_fallthru
    _
  // Predicated region
  $region22: #{tpu_custom_call.1} parent=0 // pred_check
    _
  $region23: #{tpu_custom_call.1} parent=0 // pred_check_branch
    %31 = sbr.rel (0) target = $region25
  $region24: #{tpu_custom_call.1} parent=0 // pred_region
    _
  $region25: #{tpu_custom_call.1} parent=0 // pred_fallthru
    _
  // Predicated region
  $region26: #{tpu_custom_call.1} parent=0 // pred_check
    _
  $region27: #{tpu_custom_call.1} parent=0 // pred_check_branch
    %33 = sbr.rel (0) target = $region29
  $region28: #{tpu_custom_call.1} parent=0 // pred_region
    _
  $region29: #{tpu_custom_call.1} parent=0 // pred_fallthru
    _
  // Predicated region
  $region30: #{tpu_custom_call.1} parent=0 // pred_check
    _
  $region31: #{tpu_custom_call.1} parent=0 // pred_check_branch
    %35 = sbr.rel (0) target = $region33
  $region32: #{tpu_custom_call.1} parent=0 // pred_region
    _
  $region33: #{tpu_custom_call.1} parent=0 // pred_fallthru
    _
  // Predicated region
  $region34: #{tpu_custom_call.1} parent=0 // pred_check
    _
  $region35: #{tpu_custom_call.1} parent=0 // pred_check_branch
    %37 = sbr.rel (0) target = $region37
  $region36: #{tpu_custom_call.1} parent=0 // pred_region
    _
  $region37: #{tpu_custom_call.1} parent=0 // pred_fallthru
    _
  // Predicated region
  $region38: #{tpu_custom_call.1} parent=0 // pred_check
    _
  $region39: #{tpu_custom_call.1} parent=0 // pred_check_branch
    %39 = sbr.rel (0) target = $region41
  $region40: #{tpu_custom_call.1} parent=0 // pred_region
    _
  $region41: #{tpu_custom_call.1} parent=0 // pred_fallthru
    _
  // Predicated region
  $region42: #{tpu_custom_call.1} parent=0 // pred_check
    _
  $region43: #{tpu_custom_call.1} parent=0 // pred_check_branch
    %41 = sbr.rel (0) target = $region45
  $region44: #{tpu_custom_call.1} parent=0 // pred_region
    _
  $region45: #{tpu_custom_call.1} parent=0 // pred_fallthru
    _
  // Predicated region
  $region46: #{tpu_custom_call.1} parent=0 // pred_check
    _
  $region47: #{tpu_custom_call.1} parent=0 // pred_check_branch
    %43 = sbr.rel (0) target = $region49
  $region48: #{tpu_custom_call.1} parent=0 // pred_region
    _
  $region49: #{tpu_custom_call.1} parent=0 // pred_fallthru
    _
  %v45 = vld [vmem:[%s1] sm:$0xff]
  %v46 = vld [vmem:[%s1 + $0x8] sm:$0xff]
  %v47 = vpack.c.bf16 %v46, %v45
  %v48 = vld [vmem:[%s2] sm:$0xf]
  %v49 = vld [vmem:[%s2 + $0x4] sm:$0xf]
  %v50 = vld [vmem:[%s2 + $0x8] sm:$0xf]
  %v51 = vld [vmem:[%s2 + $0xc] sm:$0xf]
  %v52 = vld [vmem:[%s3] sm:$0x1]
  %v54 = vperm.slane %v52, 0
  %v60 = vunpack.c.l.b16 %v48
  %v61 = vunpack.c.l.b16 %v49
  %v62 = vunpack.c.l.b16 %v50
  %v63 = vunpack.c.l.b16 %v51
  %v64 = vpack.c.b16 %v61, %v60
  %v65 = vpack.c.b16 %v63, %v62
  %vm68 = vcmask 261120
  %v70 = vsel %vm68, %v47, 0
  %72 = vmatpush.bf16.msra.mxu0 0
  %73 = vmatpush.bf16.msra.mxu0 0
  %74 = vmatpush.bf16.msra.mxu0 0
  %75 = vmatpush.bf16.msra.mxu0 0
  %76 = vmatpush.bf16.msra.mxu0 0
  %77 = vmatpush.bf16.msra.mxu0 0
  %78 = vmatpush.bf16.msra.mxu0 %v65
  %79 = vmatpush.bf16.msra.mxu0 %v64
  %80 = vmatmul.bf16.gmra.mxu0 %v70
  %v81 = vpop.f32.mrf.mxu0
  %v82 = vadd.f32 %v54, %v81
  %v83 = vpop.f32.mrf.mxu0
  %v84 = vadd.f32 %v54, %v83
  %85 = vdwg.mxu0
  %v86 = vmax.f32 %v82, 0.0
  %v87 = vmax.f32 %v84, 0.0
  %v88 = vpack.c.bf16 %v87, %v86
  %v89 = vld [vmem:[%s4] sm:$0xf]
  %v90 = vld [vmem:[%s4 + $0x4] sm:$0xf]
  %v91 = vld [vmem:[%s4 + $0x8] sm:$0xf]
  %v92 = vld [vmem:[%s4 + $0xc] sm:$0xf]
  %v93 = vld [vmem:[%s4 + $0x10] sm:$0xf]
  %v94 = vld [vmem:[%s4 + $0x14] sm:$0xf]
  %v95 = vld [vmem:[%s4 + $0x18] sm:$0xf]
  %v96 = vld [vmem:[%s4 + $0x1c] sm:$0xf]
  %v97 = vld [vmem:[%s4 + $0x20] sm:$0xf]
  %v98 = vld [vmem:[%s4 + $0x24] sm:$0xf]
  %v99 = vld [vmem:[%s4 + $0x28] sm:$0xf]
  %v100 = vld [vmem:[%s4 + $0x2c] sm:$0xf]
  %v101 = vld [vmem:[%s4 + $0x30] sm:$0xf]
  %v102 = vld [vmem:[%s4 + $0x34] sm:$0xf]
  %v103 = vld [vmem:[%s4 + $0x38] sm:$0xf]
  %v104 = vld [vmem:[%s4 + $0x3c] sm:$0xf]
  %v105 = vld [vmem:[%s5] sm:$0x1]
  %v107 = vperm.slane %v105, 0
  %v125 = vunpack.c.l.b16 %v89
  %v126 = vunpack.c.l.b16 %v90
  %v127 = vunpack.c.l.b16 %v91
  %v128 = vunpack.c.l.b16 %v92
  %v129 = vunpack.c.l.b16 %v93
  %v130 = vunpack.c.l.b16 %v94
  %v131 = vunpack.c.l.b16 %v95
  %v132 = vunpack.c.l.b16 %v96
  %v133 = vunpack.c.l.b16 %v97
  %v134 = vunpack.c.l.b16 %v98
  %v135 = vunpack.c.l.b16 %v99
  %v136 = vunpack.c.l.b16 %v100
  %v137 = vunpack.c.l.b16 %v101
  %v138 = vunpack.c.l.b16 %v102
  %v139 = vunpack.c.l.b16 %v103
  %v140 = vunpack.c.l.b16 %v104
  %v141 = vpack.c.b16 %v126, %v125
  %v142 = vpack.c.b16 %v128, %v127
  %v143 = vpack.c.b16 %v130, %v129
  %v144 = vpack.c.b16 %v132, %v131
  %v145 = vpack.c.b16 %v134, %v133
  %v146 = vpack.c.b16 %v136, %v135
  %v147 = vpack.c.b16 %v138, %v137
  %v148 = vpack.c.b16 %v140, %v139
  %157 = vmatpush.bf16.msra.mxu0 %v148
  %158 = vmatpush.bf16.msra.mxu0 %v147
  %159 = vmatpush.bf16.msra.mxu0 %v146
  %160 = vmatpush.bf16.msra.mxu0 %v145
  %161 = vmatpush.bf16.msra.mxu0 %v144
  %162 = vmatpush.bf16.msra.mxu0 %v143
  %163 = vmatpush.bf16.msra.mxu0 %v142
  %164 = vmatpush.bf16.msra.mxu0 %v141
  %165 = vmatmul.bf16.gmra.mxu0 %v88
  %v166 = vpop.f32.mrf.mxu0
  %v167 = vadd.f32 %v107, %v166
  %v168 = vpop.f32.mrf.mxu0
  %v169 = vadd.f32 %v107, %v168
  %170 = vdwg.mxu0
  %v171 = vmax.f32 %v167, 0.0
  %v172 = vmax.f32 %v169, 0.0
  %v173 = vpack.c.bf16 %v172, %v171
  %v174 = vld [vmem:[%s6] sm:$0xf]
  %v175 = vld [vmem:[%s6 + $0x4] sm:$0xf]
  %v176 = vld [vmem:[%s6 + $0x8] sm:$0xf]
  %v177 = vld [vmem:[%s6 + $0xc] sm:$0xf]
  %v178 = vld [vmem:[%s6 + $0x10] sm:$0xf]
  %v179 = vld [vmem:[%s6 + $0x14] sm:$0xf]
  %v180 = vld [vmem:[%s6 + $0x18] sm:$0xf]
  %v181 = vld [vmem:[%s6 + $0x1c] sm:$0xf]
  %v182 = vld [vmem:[%s7] sm:$0x1]
  %v184 = vperm.slane %v182, 0
  %v194 = vunpack.c.l.b16 %v174
  %v195 = vunpack.c.l.b16 %v175
  %v196 = vunpack.c.l.b16 %v176
  %v197 = vunpack.c.l.b16 %v177
  %v198 = vunpack.c.l.b16 %v178
  %v199 = vunpack.c.l.b16 %v179
  %v200 = vunpack.c.l.b16 %v180
  %v201 = vunpack.c.l.b16 %v181
  %v202 = vpack.c.b16 %v195, %v194
  %v203 = vpack.c.b16 %v197, %v196
  %v204 = vpack.c.b16 %v199, %v198
  %v205 = vpack.c.b16 %v201, %v200
  %vm210 = vcmask 523264
  %v212 = vsel %vm210, %v173, 0
  %214 = vmatpush.bf16.msra.mxu0 0
  %215 = vmatpush.bf16.msra.mxu0 0
  %216 = vmatpush.bf16.msra.mxu0 0
  %217 = vmatpush.bf16.msra.mxu0 0
  %218 = vmatpush.bf16.msra.mxu0 %v205
  %219 = vmatpush.bf16.msra.mxu0 %v204
  %220 = vmatpush.bf16.msra.mxu0 %v203
  %221 = vmatpush.bf16.msra.mxu0 %v202
  %222 = vmatmul.bf16.gmra.mxu0 %v212
  %v223 = vpop.f32.mrf.mxu0
  %v224 = vadd.f32 %v184, %v223
  %v225 = vpop.f32.mrf.mxu0
  %v226 = vadd.f32 %v184, %v225
  %227 = vdwg.mxu0
  %v228 = vmax.f32 %v224, 0.0
  %v229 = vmax.f32 %v226, 0.0
  %v230 = vpack.c.bf16 %v229, %v228
  %v231 = vld [vmem:[%s8] sm:$0xf]
  %v232 = vld [vmem:[%s8 + $0x4] sm:$0xf]
  %v233 = vld [vmem:[%s8 + $0x8] sm:$0xf]
  %v234 = vld [vmem:[%s8 + $0xc] sm:$0xf]
  %v235 = vld [vmem:[%s9] sm:$0x1]
  %v237 = vperm.slane %v235, 0
  %v243 = vunpack.c.l.b16 %v231
  %v244 = vunpack.c.l.b16 %v232
  %v245 = vunpack.c.l.b16 %v233
  %v246 = vunpack.c.l.b16 %v234
  %v247 = vpack.c.b16 %v244, %v243
  %v248 = vpack.c.b16 %v246, %v245
  %v252 = vsel %vm68, %v230, 0
  %254 = vmatpush.bf16.msra.mxu0 0
  %255 = vmatpush.bf16.msra.mxu0 0
  %256 = vmatpush.bf16.msra.mxu0 0
  %257 = vmatpush.bf16.msra.mxu0 0
  %258 = vmatpush.bf16.msra.mxu0 0
  %259 = vmatpush.bf16.msra.mxu0 0
  %260 = vmatpush.bf16.msra.mxu0 %v248
  %261 = vmatpush.bf16.msra.mxu0 %v247
  %262 = vmatmul.bf16.gmra.mxu0 %v252
  %v263 = vpop.f32.mrf.mxu0
  %v264 = vadd.f32 %v237, %v263
  %v265 = vpop.f32.mrf.mxu0
  %v266 = vadd.f32 %v237, %v265
  %267 = vdwg.mxu0
  %v268 = vmax.f32 %v264, 0.0
  %v269 = vmax.f32 %v266, 0.0
  %v270 = vpack.c.bf16 %v269, %v268
  %v271 = vld [vmem:[%s10] sm:$0xf]
  %v272 = vld [vmem:[%s10 + $0x4] sm:$0xf]
  %v273 = vld [vmem:[%s11] sm:$0x1]
  %v275 = vperm.slane %v273, 0
  %v279 = vunpack.c.l.b16 %v271
  %v280 = vunpack.c.l.b16 %v272
  %v281 = vpack.c.b16 %v280, %v279
  %vm283 = vcmask 130048
  %v285 = vsel %vm283, %v270, 0
  %287 = vmatpush.bf16.msra.mxu0 0
  %288 = vmatpush.bf16.msra.mxu0 0
  %289 = vmatpush.bf16.msra.mxu0 0
  %290 = vmatpush.bf16.msra.mxu0 0
  %291 = vmatpush.bf16.msra.mxu0 0
  %292 = vmatpush.bf16.msra.mxu0 0
  %293 = vmatpush.bf16.msra.mxu0 0
  %294 = vmatpush.bf16.msra.mxu0 %v281
  %295 = vmatmul.bf16.gmra.mxu0 %v285
  %v296 = vpop.f32.mrf.mxu0
  %v297 = vadd.f32 %v275, %v296
  %v298 = vpop.f32.mrf.mxu0
  %v299 = vadd.f32 %v275, %v298
  %300 = vdwg.mxu0
  %vm301 = vcmask 31744
  %302 = vst.msk [vmem:[%s12] sm:$0xff] %vm301, %v297
  %303 = vst.msk [vmem:[%s12 + $0x8] sm:$0xff] %vm301, %v299
  %s304 = sld [smem:[#allocation2]]
  %v305 = vstv %s304
  %v306 = vrcp.pop %v305
  %v307 = vmul.f32 %v305, %v306
  %v308 = vsub.f32 1.0, %v307
  %v309 = vmul.f32 %v306, %v308
  %v310 = vadd.f32 %v306, %v309
  %vm311 = vweird.f32 %v305
  %vm312 = vweird.f32 %v306
  %vm313 = vmor %vm311, %vm312
  %v314 = vsel %vm313, %v306, %v310
  %v315 = vand.u32 2147483647, %v305
  %vm316 = vcmp.eq.f32.partialorder %v315, 8.507059e+37
  %v317 = vand.u32 %v305, 2147483648
  %v318 = vor.u32 1.1754944e-38, %v317
  %v319 = vsel %vm316, %v318, %v314
  %s320 = vtos %v319
  %v321 = vstv %s320
  %v322 = vmul.f32 %v297, %v321
  %v323 = vmul.f32 %v299, %v321
  %324 = vmax.xlane.f32.xlu0 %v322
  %v325 = vpop.xlane.xlu0 %324
  %326 = vmax.xlane.f32.xlu0 %v323
  %v327 = vpop.xlane.xlu0 %326
  %v328 = vsub.f32 %v322, %v325
  %v329 = vsub.f32 %v323, %v327
  %v330 = vmul.f32 %v328, 1.442695
  %v331 = vpow.pop %v330
  %v332 = vmul.f32 %v329, 1.442695
  %v333 = vpow.pop %v332
  %334 = vadd.xlane.f32.xlu0 %v331
  %v335 = vpop.xlane.xlu0 %334
  %336 = vadd.xlane.f32.xlu0 %v333
  %v337 = vpop.xlane.xlu0 %336
  %v338 = vrcp.pop %v335
  %v339 = vmul.f32 %v335, %v338
  %v340 = vsub.f32 1.0, %v339
  %v341 = vmul.f32 %v338, %v340
  %v342 = vadd.f32 %v338, %v341
  %vm343 = vweird.f32 %v335
  %vm344 = vweird.f32 %v338
  %vm345 = vmor %vm343, %vm344
  %v346 = vsel %vm345, %v338, %v342
  %v347 = vand.u32 2147483647, %v335
  %vm348 = vcmp.eq.f32.partialorder %v347, 8.507059e+37
  %v349 = vand.u32 %v335, 2147483648
  %v350 = vor.u32 1.1754944e-38, %v349
  %v351 = vsel %vm348, %v350, %v346
  %v352 = vmul.f32 1.0, %v351
  %v353 = vrcp.pop %v337
  %v354 = vmul.f32 %v337, %v353
  %v355 = vsub.f32 1.0, %v354
  %v356 = vmul.f32 %v353, %v355
  %v357 = vadd.f32 %v353, %v356
  %vm358 = vweird.f32 %v337
  %vm359 = vweird.f32 %v353
  %vm360 = vmor %vm358, %vm359
  %v361 = vsel %vm360, %v353, %v357
  %v362 = vand.u32 2147483647, %v337
  %vm363 = vcmp.eq.f32.partialorder %v362, 8.507059e+37
  %v364 = vand.u32 %v337, 2147483648
  %v365 = vor.u32 1.1754944e-38, %v364
  %v366 = vsel %vm363, %v365, %v361
  %v367 = vmul.f32 1.0, %v366
  %v368 = vmul.f32 %v331, %v352
  %v369 = vmul.f32 %v333, %v367
  %370 = vst.msk [vmem:[%s13] sm:$0xff] %vm301, %v368
  %371 = vst.msk [vmem:[%s13 + $0x8] sm:$0xff] %vm301, %v369
  // Predicated region
  $region50: #{tpu_custom_call.1} parent=0 // pred_check
    _
  $region51: #{tpu_custom_call.1} parent=0 // pred_check_branch
    %373 = sbr.rel (0) target = $region53
  $region52: #{tpu_custom_call.1} parent=0 // pred_region
    _
  $region53: #{tpu_custom_call.1} parent=0 // pred_fallthru
    _
  // Predicated region
  $region54: #{tpu_custom_call.1} parent=0 // pred_check
    _
  $region55: #{tpu_custom_call.1} parent=0 // pred_check_branch
    %375 = sbr.rel (0) target = $region57
  $region56: #{tpu_custom_call.1} parent=0 // pred_region
    _
  $region57: #{tpu_custom_call.1} parent=0 // pred_fallthru
    _
  // Predicated region
  $region58: #{tpu_custom_call.1} parent=0 // pred_check
    _
  $region59: #{tpu_custom_call.1} parent=0 // pred_check_branch
    %377 = sbr.rel (0) target = $region61
  $region60: #{tpu_custom_call.1} parent=0 // pred_region
    _
  $region61: #{tpu_custom_call.1} parent=0 // pred_fallthru
    _
  // Predicated region
  $region62: #{tpu_custom_call.1} parent=0 // pred_check
    _
  $region63: #{tpu_custom_call.1} parent=0 // pred_check_branch
    %379 = sbr.rel (0) target = $region65
  $region64: #{tpu_custom_call.1} parent=0 // pred_region
    _
  $region65: #{tpu_custom_call.1} parent=0 // pred_fallthru
    _

</llo_original>
